<compile_context>
chip_gen: v7x
topology: tpu7x:2x2x1
jax: 0.10.0
libtpu: 0.0.40
codegen_flags: <defaults>
</compile_context>

<pallas_src>
import jax
import jax.numpy as jnp
from jax.experimental import pallas as pl
from jax.experimental.pallas import tpu as pltpu


def _round_up(v, m):
    return (v + m - 1) // m * m


def linear_leaky_kernel(w_ref, x_ref, o_ref):
    """Tiny Linear + leaky-ReLU on the VPU.

    w_ref : (N, K) float32 in SMEM   (PyTorch Linear weight layout: out x in)
    x_ref : (K, TILE_M) float32 VMEM -- row index M on the 128-lane axis
    o_ref : (N, TILE_M) float32 VMEM -- lane-dense output (M on lanes)
    """
    n_out = o_ref.shape[0]
    k_in = x_ref.shape[0]
    x = x_ref[...]                          # (K, TILE_M)
    for n in range(n_out):                  # N=8  -> fully unrolled at trace time
        acc = x[0, :] * w_ref[n, 0]         # SMEM scalar * vector broadcast
        for k in range(1, k_in):            # K=6  -> fully unrolled
            acc = acc + x[k, :] * w_ref[n, k]
        # where(acc > 0, acc, 0.01*acc) == max(acc, 0.01*acc)
        o_ref[n, :] = jnp.maximum(acc, acc * 0.01)


def model_forward(x, weight, *, tile_m=512):
    """
    x      : (B, H, W, in_features)  float32
    weight : (out_features, in_features)  float32  (PyTorch Linear layout)
    returns: (B, H, W, out_features)
    """
    B, H, W, K = x.shape
    N = weight.shape[0]
    M = B * H * W

    # Put the long M axis on lanes: (M, K) -> (K, M).
    xt = x.reshape(M, K).T

    # Pad M to a lane-aligned multiple of the tile size.
    tile_m = min(tile_m, _round_up(M, 128))
    tile_m = _round_up(tile_m, 128)
    m_pad = _round_up(M, tile_m)
    if m_pad != M:
        xt = jnp.pad(xt, ((0, 0), (0, m_pad - M)))

    grid = (m_pad // tile_m,)

    out_t = pl.pallas_call(
        linear_leaky_kernel,
        out_shape=jax.ShapeDtypeStruct((N, m_pad), jnp.float32),
        grid=grid,
        in_specs=[
            # Tiny (N, K) weight: whole array, resident in SMEM, reused by
            # every grid step (scalar reads -> broadcast FMAs on the VPU).
            pl.BlockSpec(memory_space=pltpu.MemorySpace.SMEM),
            # x tile: (K, tile_m) with M on lanes.
            pl.BlockSpec((K, tile_m), lambda i: (0, i)),
        ],
        out_specs=pl.BlockSpec((N, tile_m), lambda i: (0, i)),
        compiler_params=pltpu.CompilerParams(
            dimension_semantics=("parallel",),
        ),
    )(weight, xt)

    # (N, m_pad) -> (M, N) -> (B, H, W, N)
    return out_t[:, :M].T.reshape(B, H, W, N)


if __name__ == "__main__":
    key = jax.random.PRNGKey(0)
    kx, kw = jax.random.split(key)

    B, H, W, IN_F, OUT_F = 1, 8, 8, 6, 8

    # Deterministic synthetic parameters (PyTorch Linear weight shape: (out, in))
    bound = 1.0 / (IN_F ** 0.5)
    weight = jax.random.uniform(
        kw, (OUT_F, IN_F), dtype=jnp.float32, minval=-bound, maxval=bound
    )

    x = jax.random.normal(kx, (B, H, W, IN_F), dtype=jnp.float32)

    out = model_forward(x, weight)
    jax.block_until_ready(out)

    # Reference check in plain JAX
    ref_v1 = x.reshape(-1, IN_F) @ weight.T
    ref = jnp.where(ref_v1 > 0, ref_v1, ref_v1 * 0.01).reshape(B, H, W, OUT_F)
    assert out.shape == (B, H, W, OUT_F)
    assert jnp.allclose(out, ref, atol=1e-5, rtol=1e-5)

    print("KERNEL_OK")
</pallas_src>

<mosaic_0001>
module attributes {stable_mosaic.version = 11 : i64} {
  func.func @linear_leaky_kernel(%arg0: i32, %arg1: memref<8x6xf32, #tpu.memory_space<smem>>, %arg2: memref<6x128xf32, #tpu.memory_space<vmem>>, %arg3: memref<8x128xf32, #tpu.memory_space<vmem>>) attributes {dimension_semantics = [#tpu.dimension_semantics<parallel>], iteration_bounds = array<i64: 1>, scalar_prefetch = 0 : i64, scratch_operands = 0 : i64, tpu.core_type = #tpu.core_type<tc>, window_params = [{transform_indices = @transform_0, window_bounds = array<i64: 8, 6>}, {transform_indices = @transform_1, window_bounds = array<i64: 6, 128>}, {transform_indices = @transform_2, window_bounds = array<i64: 8, 128>}]} {
    %c0 = arith.constant 0 : index
    %c0_0 = arith.constant 0 : index
    %0 = vector.load %arg2[%c0, %c0_0] : memref<6x128xf32, #tpu.memory_space<vmem>>, vector<6x128xf32>
    %1 = vector.extract_strided_slice %0 {offsets = [0, 0], sizes = [1, 128], strides = [1, 1]} : vector<6x128xf32> to vector<1x128xf32>
    %2 = vector.shape_cast %1 : vector<1x128xf32> to vector<128xf32>
    %c0_1 = arith.constant 0 : index
    %c0_2 = arith.constant 0 : index
    %3 = memref.load %arg1[%c0_1, %c0_2] : memref<8x6xf32, #tpu.memory_space<smem>>
    %4 = vector.broadcast %3 : f32 to vector<128xf32>
    %5 = arith.mulf %2, %4 : vector<128xf32>
    %6 = vector.extract_strided_slice %0 {offsets = [1, 0], sizes = [1, 128], strides = [1, 1]} : vector<6x128xf32> to vector<1x128xf32>
    %7 = vector.shape_cast %6 : vector<1x128xf32> to vector<128xf32>
    %c0_3 = arith.constant 0 : index
    %c1 = arith.constant 1 : index
    %8 = memref.load %arg1[%c0_3, %c1] : memref<8x6xf32, #tpu.memory_space<smem>>
    %9 = vector.broadcast %8 : f32 to vector<128xf32>
    %10 = arith.mulf %7, %9 : vector<128xf32>
    %11 = arith.addf %5, %10 : vector<128xf32>
    %12 = vector.extract_strided_slice %0 {offsets = [2, 0], sizes = [1, 128], strides = [1, 1]} : vector<6x128xf32> to vector<1x128xf32>
    %13 = vector.shape_cast %12 : vector<1x128xf32> to vector<128xf32>
    %c0_4 = arith.constant 0 : index
    %c2 = arith.constant 2 : index
    %14 = memref.load %arg1[%c0_4, %c2] : memref<8x6xf32, #tpu.memory_space<smem>>
    %15 = vector.broadcast %14 : f32 to vector<128xf32>
    %16 = arith.mulf %13, %15 : vector<128xf32>
    %17 = arith.addf %11, %16 : vector<128xf32>
    %18 = vector.extract_strided_slice %0 {offsets = [3, 0], sizes = [1, 128], strides = [1, 1]} : vector<6x128xf32> to vector<1x128xf32>
    %19 = vector.shape_cast %18 : vector<1x128xf32> to vector<128xf32>
    %c0_5 = arith.constant 0 : index
    %c3 = arith.constant 3 : index
    %20 = memref.load %arg1[%c0_5, %c3] : memref<8x6xf32, #tpu.memory_space<smem>>
    %21 = vector.broadcast %20 : f32 to vector<128xf32>
    %22 = arith.mulf %19, %21 : vector<128xf32>
    %23 = arith.addf %17, %22 : vector<128xf32>
    %24 = vector.extract_strided_slice %0 {offsets = [4, 0], sizes = [1, 128], strides = [1, 1]} : vector<6x128xf32> to vector<1x128xf32>
    %25 = vector.shape_cast %24 : vector<1x128xf32> to vector<128xf32>
    %c0_6 = arith.constant 0 : index
    %c4 = arith.constant 4 : index
    %26 = memref.load %arg1[%c0_6, %c4] : memref<8x6xf32, #tpu.memory_space<smem>>
    %27 = vector.broadcast %26 : f32 to vector<128xf32>
    %28 = arith.mulf %25, %27 : vector<128xf32>
    %29 = arith.addf %23, %28 : vector<128xf32>
    %30 = vector.extract_strided_slice %0 {offsets = [5, 0], sizes = [1, 128], strides = [1, 1]} : vector<6x128xf32> to vector<1x128xf32>
    %31 = vector.shape_cast %30 : vector<1x128xf32> to vector<128xf32>
    %c0_7 = arith.constant 0 : index
    %c5 = arith.constant 5 : index
    %32 = memref.load %arg1[%c0_7, %c5] : memref<8x6xf32, #tpu.memory_space<smem>>
    %33 = vector.broadcast %32 : f32 to vector<128xf32>
    %34 = arith.mulf %31, %33 : vector<128xf32>
    %35 = arith.addf %29, %34 : vector<128xf32>
    %cst = arith.constant 0.00999999977 : f32
    %36 = vector.broadcast %cst : f32 to vector<128xf32>
    %37 = arith.mulf %35, %36 : vector<128xf32>
    %38 = arith.maximumf %35, %37 : vector<128xf32>
    %c0_8 = arith.constant 0 : index
    %c0_9 = arith.constant 0 : index
    %39 = vector.load %arg3[%c0_8, %c0_9] : memref<8x128xf32, #tpu.memory_space<vmem>>, vector<1x128xf32>
    %40 = vector.shape_cast %39 : vector<1x128xf32> to vector<128xf32>
    %41 = vector.shape_cast %38 : vector<128xf32> to vector<1x128xf32>
    tpu.vector_store %arg3[%c0_8, %c0_9], %41 {strides = array<i32>} : memref<8x128xf32, #tpu.memory_space<vmem>>, vector<1x128xf32>,
    %42 = vector.extract_strided_slice %0 {offsets = [0, 0], sizes = [1, 128], strides = [1, 1]} : vector<6x128xf32> to vector<1x128xf32>
    %43 = vector.shape_cast %42 : vector<1x128xf32> to vector<128xf32>
    %c1_10 = arith.constant 1 : index
    %c0_11 = arith.constant 0 : index
    %44 = memref.load %arg1[%c1_10, %c0_11] : memref<8x6xf32, #tpu.memory_space<smem>>
    %45 = vector.broadcast %44 : f32 to vector<128xf32>
    %46 = arith.mulf %43, %45 : vector<128xf32>
    %47 = vector.extract_strided_slice %0 {offsets = [1, 0], sizes = [1, 128], strides = [1, 1]} : vector<6x128xf32> to vector<1x128xf32>
    %48 = vector.shape_cast %47 : vector<1x128xf32> to vector<128xf32>
    %c1_12 = arith.constant 1 : index
    %c1_13 = arith.constant 1 : index
    %49 = memref.load %arg1[%c1_12, %c1_13] : memref<8x6xf32, #tpu.memory_space<smem>>
    %50 = vector.broadcast %49 : f32 to vector<128xf32>
    %51 = arith.mulf %48, %50 : vector<128xf32>
    %52 = arith.addf %46, %51 : vector<128xf32>
    %53 = vector.extract_strided_slice %0 {offsets = [2, 0], sizes = [1, 128], strides = [1, 1]} : vector<6x128xf32> to vector<1x128xf32>
    %54 = vector.shape_cast %53 : vector<1x128xf32> to vector<128xf32>
    %c1_14 = arith.constant 1 : index
    %c2_15 = arith.constant 2 : index
    %55 = memref.load %arg1[%c1_14, %c2_15] : memref<8x6xf32, #tpu.memory_space<smem>>
    %56 = vector.broadcast %55 : f32 to vector<128xf32>
    %57 = arith.mulf %54, %56 : vector<128xf32>
    %58 = arith.addf %52, %57 : vector<128xf32>
    %59 = vector.extract_strided_slice %0 {offsets = [3, 0], sizes = [1, 128], strides = [1, 1]} : vector<6x128xf32> to vector<1x128xf32>
    %60 = vector.shape_cast %59 : vector<1x128xf32> to vector<128xf32>
    %c1_16 = arith.constant 1 : index
    %c3_17 = arith.constant 3 : index
    %61 = memref.load %arg1[%c1_16, %c3_17] : memref<8x6xf32, #tpu.memory_space<smem>>
    %62 = vector.broadcast %61 : f32 to vector<128xf32>
    %63 = arith.mulf %60, %62 : vector<128xf32>
    %64 = arith.addf %58, %63 : vector<128xf32>
    %65 = vector.extract_strided_slice %0 {offsets = [4, 0], sizes = [1, 128], strides = [1, 1]} : vector<6x128xf32> to vector<1x128xf32>
    %66 = vector.shape_cast %65 : vector<1x128xf32> to vector<128xf32>
    %c1_18 = arith.constant 1 : index
    %c4_19 = arith.constant 4 : index
    %67 = memref.load %arg1[%c1_18, %c4_19] : memref<8x6xf32, #tpu.memory_space<smem>>
    %68 = vector.broadcast %67 : f32 to vector<128xf32>
    %69 = arith.mulf %66, %68 : vector<128xf32>
    %70 = arith.addf %64, %69 : vector<128xf32>
    %71 = vector.extract_strided_slice %0 {offsets = [5, 0], sizes = [1, 128], strides = [1, 1]} : vector<6x128xf32> to vector<1x128xf32>
    %72 = vector.shape_cast %71 : vector<1x128xf32> to vector<128xf32>
    %c1_20 = arith.constant 1 : index
    %c5_21 = arith.constant 5 : index
    %73 = memref.load %arg1[%c1_20, %c5_21] : memref<8x6xf32, #tpu.memory_space<smem>>
    %74 = vector.broadcast %73 : f32 to vector<128xf32>
    %75 = arith.mulf %72, %74 : vector<128xf32>
    %76 = arith.addf %70, %75 : vector<128xf32>
    %cst_22 = arith.constant 0.00999999977 : f32
    %77 = vector.broadcast %cst_22 : f32 to vector<128xf32>
    %78 = arith.mulf %76, %77 : vector<128xf32>
    %79 = arith.maximumf %76, %78 : vector<128xf32>
    %c1_23 = arith.constant 1 : index
    %c0_24 = arith.constant 0 : index
    %80 = vector.load %arg3[%c1_23, %c0_24] : memref<8x128xf32, #tpu.memory_space<vmem>>, vector<1x128xf32>
    %81 = vector.shape_cast %80 : vector<1x128xf32> to vector<128xf32>
    %82 = vector.shape_cast %79 : vector<128xf32> to vector<1x128xf32>
    tpu.vector_store %arg3[%c1_23, %c0_24], %82 {strides = array<i32>} : memref<8x128xf32, #tpu.memory_space<vmem>>, vector<1x128xf32>,
    %83 = vector.extract_strided_slice %0 {offsets = [0, 0], sizes = [1, 128], strides = [1, 1]} : vector<6x128xf32> to vector<1x128xf32>
    %84 = vector.shape_cast %83 : vector<1x128xf32> to vector<128xf32>
    %c2_25 = arith.constant 2 : index
    %c0_26 = arith.constant 0 : index
    %85 = memref.load %arg1[%c2_25, %c0_26] : memref<8x6xf32, #tpu.memory_space<smem>>
    %86 = vector.broadcast %85 : f32 to vector<128xf32>
    %87 = arith.mulf %84, %86 : vector<128xf32>
    %88 = vector.extract_strided_slice %0 {offsets = [1, 0], sizes = [1, 128], strides = [1, 1]} : vector<6x128xf32> to vector<1x128xf32>
    %89 = vector.shape_cast %88 : vector<1x128xf32> to vector<128xf32>
    %c2_27 = arith.constant 2 : index
    %c1_28 = arith.constant 1 : index
    %90 = memref.load %arg1[%c2_27, %c1_28] : memref<8x6xf32, #tpu.memory_space<smem>>
    %91 = vector.broadcast %90 : f32 to vector<128xf32>
    %92 = arith.mulf %89, %91 : vector<128xf32>
    %93 = arith.addf %87, %92 : vector<128xf32>
    %94 = vector.extract_strided_slice %0 {offsets = [2, 0], sizes = [1, 128], strides = [1, 1]} : vector<6x128xf32> to vector<1x128xf32>
    %95 = vector.shape_cast %94 : vector<1x128xf32> to vector<128xf32>
    %c2_29 = arith.constant 2 : index
    %c2_30 = arith.constant 2 : index
    %96 = memref.load %arg1[%c2_29, %c2_30] : memref<8x6xf32, #tpu.memory_space<smem>>
    %97 = vector.broadcast %96 : f32 to vector<128xf32>
    %98 = arith.mulf %95, %97 : vector<128xf32>
    %99 = arith.addf %93, %98 : vector<128xf32>
    %100 = vector.extract_strided_slice %0 {offsets = [3, 0], sizes = [1, 128], strides = [1, 1]} : vector<6x128xf32> to vector<1x128xf32>
    %101 = vector.shape_cast %100 : vector<1x128xf32> to vector<128xf32>
    %c2_31 = arith.constant 2 : index
    %c3_32 = arith.constant 3 : index
    %102 = memref.load %arg1[%c2_31, %c3_32] : memref<8x6xf32, #tpu.memory_space<smem>>
    %103 = vector.broadcast %102 : f32 to vector<128xf32>
    %104 = arith.mulf %101, %103 : vector<128xf32>
    %105 = arith.addf %99, %104 : vector<128xf32>
    %106 = vector.extract_strided_slice %0 {offsets = [4, 0], sizes = [1, 128], strides = [1, 1]} : vector<6x128xf32> to vector<1x128xf32>
    %107 = vector.shape_cast %106 : vector<1x128xf32> to vector<128xf32>
    %c2_33 = arith.constant 2 : index
    %c4_34 = arith.constant 4 : index
    %108 = memref.load %arg1[%c2_33, %c4_34] : memref<8x6xf32, #tpu.memory_space<smem>>
    %109 = vector.broadcast %108 : f32 to vector<128xf32>
    %110 = arith.mulf %107, %109 : vector<128xf32>
    %111 = arith.addf %105, %110 : vector<128xf32>
    %112 = vector.extract_strided_slice %0 {offsets = [5, 0], sizes = [1, 128], strides = [1, 1]} : vector<6x128xf32> to vector<1x128xf32>
    %113 = vector.shape_cast %112 : vector<1x128xf32> to vector<128xf32>
    %c2_35 = arith.constant 2 : index
    %c5_36 = arith.constant 5 : index
    %114 = memref.load %arg1[%c2_35, %c5_36] : memref<8x6xf32, #tpu.memory_space<smem>>
    %115 = vector.broadcast %114 : f32 to vector<128xf32>
    %116 = arith.mulf %113, %115 : vector<128xf32>
    %117 = arith.addf %111, %116 : vector<128xf32>
    %cst_37 = arith.constant 0.00999999977 : f32
    %118 = vector.broadcast %cst_37 : f32 to vector<128xf32>
    %119 = arith.mulf %117, %118 : vector<128xf32>
    %120 = arith.maximumf %117, %119 : vector<128xf32>
    %c2_38 = arith.constant 2 : index
    %c0_39 = arith.constant 0 : index
    %121 = vector.load %arg3[%c2_38, %c0_39] : memref<8x128xf32, #tpu.memory_space<vmem>>, vector<1x128xf32>
    %122 = vector.shape_cast %121 : vector<1x128xf32> to vector<128xf32>
    %123 = vector.shape_cast %120 : vector<128xf32> to vector<1x128xf32>
    tpu.vector_store %arg3[%c2_38, %c0_39], %123 {strides = array<i32>} : memref<8x128xf32, #tpu.memory_space<vmem>>, vector<1x128xf32>,
    %124 = vector.extract_strided_slice %0 {offsets = [0, 0], sizes = [1, 128], strides = [1, 1]} : vector<6x128xf32> to vector<1x128xf32>
    %125 = vector.shape_cast %124 : vector<1x128xf32> to vector<128xf32>
    %c3_40 = arith.constant 3 : index
    %c0_41 = arith.constant 0 : index
    %126 = memref.load %arg1[%c3_40, %c0_41] : memref<8x6xf32, #tpu.memory_space<smem>>
    %127 = vector.broadcast %126 : f32 to vector<128xf32>
    %128 = arith.mulf %125, %127 : vector<128xf32>
    %129 = vector.extract_strided_slice %0 {offsets = [1, 0], sizes = [1, 128], strides = [1, 1]} : vector<6x128xf32> to vector<1x128xf32>
    %130 = vector.shape_cast %129 : vector<1x128xf32> to vector<128xf32>
    %c3_42 = arith.constant 3 : index
    %c1_43 = arith.constant 1 : index
    %131 = memref.load %arg1[%c3_42, %c1_43] : memref<8x6xf32, #tpu.memory_space<smem>>
    %132 = vector.broadcast %131 : f32 to vector<128xf32>
    %133 = arith.mulf %130, %132 : vector<128xf32>
    %134 = arith.addf %128, %133 : vector<128xf32>
    %135 = vector.extract_strided_slice %0 {offsets = [2, 0], sizes = [1, 128], strides = [1, 1]} : vector<6x128xf32> to vector<1x128xf32>
    %136 = vector.shape_cast %135 : vector<1x128xf32> to vector<128xf32>
    %c3_44 = arith.constant 3 : index
    %c2_45 = arith.constant 2 : index
    %137 = memref.load %arg1[%c3_44, %c2_45] : memref<8x6xf32, #tpu.memory_space<smem>>
    %138 = vector.broadcast %137 : f32 to vector<128xf32>
    %139 = arith.mulf %136, %138 : vector<128xf32>
    %140 = arith.addf %134, %139 : vector<128xf32>
    %141 = vector.extract_strided_slice %0 {offsets = [3, 0], sizes = [1, 128], strides = [1, 1]} : vector<6x128xf32> to vector<1x128xf32>
    %142 = vector.shape_cast %141 : vector<1x128xf32> to vector<128xf32>
    %c3_46 = arith.constant 3 : index
    %c3_47 = arith.constant 3 : index
    %143 = memref.load %arg1[%c3_46, %c3_47] : memref<8x6xf32, #tpu.memory_space<smem>>
    %144 = vector.broadcast %143 : f32 to vector<128xf32>
    %145 = arith.mulf %142, %144 : vector<128xf32>
    %146 = arith.addf %140, %145 : vector<128xf32>
    %147 = vector.extract_strided_slice %0 {offsets = [4, 0], sizes = [1, 128], strides = [1, 1]} : vector<6x128xf32> to vector<1x128xf32>
    %148 = vector.shape_cast %147 : vector<1x128xf32> to vector<128xf32>
    %c3_48 = arith.constant 3 : index
    %c4_49 = arith.constant 4 : index
    %149 = memref.load %arg1[%c3_48, %c4_49] : memref<8x6xf32, #tpu.memory_space<smem>>
    %150 = vector.broadcast %149 : f32 to vector<128xf32>
    %151 = arith.mulf %148, %150 : vector<128xf32>
    %152 = arith.addf %146, %151 : vector<128xf32>
    %153 = vector.extract_strided_slice %0 {offsets = [5, 0], sizes = [1, 128], strides = [1, 1]} : vector<6x128xf32> to vector<1x128xf32>
    %154 = vector.shape_cast %153 : vector<1x128xf32> to vector<128xf32>
    %c3_50 = arith.constant 3 : index
    %c5_51 = arith.constant 5 : index
    %155 = memref.load %arg1[%c3_50, %c5_51] : memref<8x6xf32, #tpu.memory_space<smem>>
    %156 = vector.broadcast %155 : f32 to vector<128xf32>
    %157 = arith.mulf %154, %156 : vector<128xf32>
    %158 = arith.addf %152, %157 : vector<128xf32>
    %cst_52 = arith.constant 0.00999999977 : f32
    %159 = vector.broadcast %cst_52 : f32 to vector<128xf32>
    %160 = arith.mulf %158, %159 : vector<128xf32>
    %161 = arith.maximumf %158, %160 : vector<128xf32>
    %c3_53 = arith.constant 3 : index
    %c0_54 = arith.constant 0 : index
    %162 = vector.load %arg3[%c3_53, %c0_54] : memref<8x128xf32, #tpu.memory_space<vmem>>, vector<1x128xf32>
    %163 = vector.shape_cast %162 : vector<1x128xf32> to vector<128xf32>
    %164 = vector.shape_cast %161 : vector<128xf32> to vector<1x128xf32>
    tpu.vector_store %arg3[%c3_53, %c0_54], %164 {strides = array<i32>} : memref<8x128xf32, #tpu.memory_space<vmem>>, vector<1x128xf32>,
    %165 = vector.extract_strided_slice %0 {offsets = [0, 0], sizes = [1, 128], strides = [1, 1]} : vector<6x128xf32> to vector<1x128xf32>
    %166 = vector.shape_cast %165 : vector<1x128xf32> to vector<128xf32>
    %c4_55 = arith.constant 4 : index
    %c0_56 = arith.constant 0 : index
    %167 = memref.load %arg1[%c4_55, %c0_56] : memref<8x6xf32, #tpu.memory_space<smem>>
    %168 = vector.broadcast %167 : f32 to vector<128xf32>
    %169 = arith.mulf %166, %168 : vector<128xf32>
    %170 = vector.extract_strided_slice %0 {offsets = [1, 0], sizes = [1, 128], strides = [1, 1]} : vector<6x128xf32> to vector<1x128xf32>
    %171 = vector.shape_cast %170 : vector<1x128xf32> to vector<128xf32>
    %c4_57 = arith.constant 4 : index
    %c1_58 = arith.constant 1 : index
    %172 = memref.load %arg1[%c4_57, %c1_58] : memref<8x6xf32, #tpu.memory_space<smem>>
    %173 = vector.broadcast %172 : f32 to vector<128xf32>
    %174 = arith.mulf %171, %173 : vector<128xf32>
    %175 = arith.addf %169, %174 : vector<128xf32>
    %176 = vector.extract_strided_slice %0 {offsets = [2, 0], sizes = [1, 128], strides = [1, 1]} : vector<6x128xf32> to vector<1x128xf32>
    %177 = vector.shape_cast %176 : vector<1x128xf32> to vector<128xf32>
    %c4_59 = arith.constant 4 : index
    %c2_60 = arith.constant 2 : index
    %178 = memref.load %arg1[%c4_59, %c2_60] : memref<8x6xf32, #tpu.memory_space<smem>>
    %179 = vector.broadcast %178 : f32 to vector<128xf32>
    %180 = arith.mulf %177, %179 : vector<128xf32>
    %181 = arith.addf %175, %180 : vector<128xf32>
    %182 = vector.extract_strided_slice %0 {offsets = [3, 0], sizes = [1, 128], strides = [1, 1]} : vector<6x128xf32> to vector<1x128xf32>
    %183 = vector.shape_cast %182 : vector<1x128xf32> to vector<128xf32>
    %c4_61 = arith.constant 4 : index
    %c3_62 = arith.constant 3 : index
    %184 = memref.load %arg1[%c4_61, %c3_62] : memref<8x6xf32, #tpu.memory_space<smem>>
    %185 = vector.broadcast %184 : f32 to vector<128xf32>
    %186 = arith.mulf %183, %185 : vector<128xf32>
    %187 = arith.addf %181, %186 : vector<128xf32>
    %188 = vector.extract_strided_slice %0 {offsets = [4, 0], sizes = [1, 128], strides = [1, 1]} : vector<6x128xf32> to vector<1x128xf32>
    %189 = vector.shape_cast %188 : vector<1x128xf32> to vector<128xf32>
    %c4_63 = arith.constant 4 : index
    %c4_64 = arith.constant 4 : index
    %190 = memref.load %arg1[%c4_63, %c4_64] : memref<8x6xf32, #tpu.memory_space<smem>>
    %191 = vector.broadcast %190 : f32 to vector<128xf32>
    %192 = arith.mulf %189, %191 : vector<128xf32>
    %193 = arith.addf %187, %192 : vector<128xf32>
    %194 = vector.extract_strided_slice %0 {offsets = [5, 0], sizes = [1, 128], strides = [1, 1]} : vector<6x128xf32> to vector<1x128xf32>
    %195 = vector.shape_cast %194 : vector<1x128xf32> to vector<128xf32>
    %c4_65 = arith.constant 4 : index
    %c5_66 = arith.constant 5 : index
    %196 = memref.load %arg1[%c4_65, %c5_66] : memref<8x6xf32, #tpu.memory_space<smem>>
    %197 = vector.broadcast %196 : f32 to vector<128xf32>
    %198 = arith.mulf %195, %197 : vector<128xf32>
    %199 = arith.addf %193, %198 : vector<128xf32>
    %cst_67 = arith.constant 0.00999999977 : f32
    %200 = vector.broadcast %cst_67 : f32 to vector<128xf32>
    %201 = arith.mulf %199, %200 : vector<128xf32>
    %202 = arith.maximumf %199, %201 : vector<128xf32>
    %c4_68 = arith.constant 4 : index
    %c0_69 = arith.constant 0 : index
    %203 = vector.load %arg3[%c4_68, %c0_69] : memref<8x128xf32, #tpu.memory_space<vmem>>, vector<1x128xf32>
    %204 = vector.shape_cast %203 : vector<1x128xf32> to vector<128xf32>
    %205 = vector.shape_cast %202 : vector<128xf32> to vector<1x128xf32>
    tpu.vector_store %arg3[%c4_68, %c0_69], %205 {strides = array<i32>} : memref<8x128xf32, #tpu.memory_space<vmem>>, vector<1x128xf32>,
    %206 = vector.extract_strided_slice %0 {offsets = [0, 0], sizes = [1, 128], strides = [1, 1]} : vector<6x128xf32> to vector<1x128xf32>
    %207 = vector.shape_cast %206 : vector<1x128xf32> to vector<128xf32>
    %c5_70 = arith.constant 5 : index
    %c0_71 = arith.constant 0 : index
    %208 = memref.load %arg1[%c5_70, %c0_71] : memref<8x6xf32, #tpu.memory_space<smem>>
    %209 = vector.broadcast %208 : f32 to vector<128xf32>
    %210 = arith.mulf %207, %209 : vector<128xf32>
    %211 = vector.extract_strided_slice %0 {offsets = [1, 0], sizes = [1, 128], strides = [1, 1]} : vector<6x128xf32> to vector<1x128xf32>
    %212 = vector.shape_cast %211 : vector<1x128xf32> to vector<128xf32>
    %c5_72 = arith.constant 5 : index
    %c1_73 = arith.constant 1 : index
    %213 = memref.load %arg1[%c5_72, %c1_73] : memref<8x6xf32, #tpu.memory_space<smem>>
    %214 = vector.broadcast %213 : f32 to vector<128xf32>
    %215 = arith.mulf %212, %214 : vector<128xf32>
    %216 = arith.addf %210, %215 : vector<128xf32>
    %217 = vector.extract_strided_slice %0 {offsets = [2, 0], sizes = [1, 128], strides = [1, 1]} : vector<6x128xf32> to vector<1x128xf32>
    %218 = vector.shape_cast %217 : vector<1x128xf32> to vector<128xf32>
    %c5_74 = arith.constant 5 : index
    %c2_75 = arith.constant 2 : index
    %219 = memref.load %arg1[%c5_74, %c2_75] : memref<8x6xf32, #tpu.memory_space<smem>>
    %220 = vector.broadcast %219 : f32 to vector<128xf32>
    %221 = arith.mulf %218, %220 : vector<128xf32>
    %222 = arith.addf %216, %221 : vector<128xf32>
    %223 = vector.extract_strided_slice %0 {offsets = [3, 0], sizes = [1, 128], strides = [1, 1]} : vector<6x128xf32> to vector<1x128xf32>
    %224 = vector.shape_cast %223 : vector<1x128xf32> to vector<128xf32>
    %c5_76 = arith.constant 5 : index
    %c3_77 = arith.constant 3 : index
    %225 = memref.load %arg1[%c5_76, %c3_77] : memref<8x6xf32, #tpu.memory_space<smem>>
    %226 = vector.broadcast %225 : f32 to vector<128xf32>
    %227 = arith.mulf %224, %226 : vector<128xf32>
    %228 = arith.addf %222, %227 : vector<128xf32>
    %229 = vector.extract_strided_slice %0 {offsets = [4, 0], sizes = [1, 128], strides = [1, 1]} : vector<6x128xf32> to vector<1x128xf32>
    %230 = vector.shape_cast %229 : vector<1x128xf32> to vector<128xf32>
    %c5_78 = arith.constant 5 : index
    %c4_79 = arith.constant 4 : index
    %231 = memref.load %arg1[%c5_78, %c4_79] : memref<8x6xf32, #tpu.memory_space<smem>>
    %232 = vector.broadcast %231 : f32 to vector<128xf32>
    %233 = arith.mulf %230, %232 : vector<128xf32>
    %234 = arith.addf %228, %233 : vector<128xf32>
    %235 = vector.extract_strided_slice %0 {offsets = [5, 0], sizes = [1, 128], strides = [1, 1]} : vector<6x128xf32> to vector<1x128xf32>
    %236 = vector.shape_cast %235 : vector<1x128xf32> to vector<128xf32>
    %c5_80 = arith.constant 5 : index
    %c5_81 = arith.constant 5 : index
    %237 = memref.load %arg1[%c5_80, %c5_81] : memref<8x6xf32, #tpu.memory_space<smem>>
    %238 = vector.broadcast %237 : f32 to vector<128xf32>
    %239 = arith.mulf %236, %238 : vector<128xf32>
    %240 = arith.addf %234, %239 : vector<128xf32>
    %cst_82 = arith.constant 0.00999999977 : f32
    %241 = vector.broadcast %cst_82 : f32 to vector<128xf32>
    %242 = arith.mulf %240, %241 : vector<128xf32>
    %243 = arith.maximumf %240, %242 : vector<128xf32>
    %c5_83 = arith.constant 5 : index
    %c0_84 = arith.constant 0 : index
    %244 = vector.load %arg3[%c5_83, %c0_84] : memref<8x128xf32, #tpu.memory_space<vmem>>, vector<1x128xf32>
    %245 = vector.shape_cast %244 : vector<1x128xf32> to vector<128xf32>
    %246 = vector.shape_cast %243 : vector<128xf32> to vector<1x128xf32>
    tpu.vector_store %arg3[%c5_83, %c0_84], %246 {strides = array<i32>} : memref<8x128xf32, #tpu.memory_space<vmem>>, vector<1x128xf32>,
    %247 = vector.extract_strided_slice %0 {offsets = [0, 0], sizes = [1, 128], strides = [1, 1]} : vector<6x128xf32> to vector<1x128xf32>
    %248 = vector.shape_cast %247 : vector<1x128xf32> to vector<128xf32>
    %c6 = arith.constant 6 : index
    %c0_85 = arith.constant 0 : index
    %249 = memref.load %arg1[%c6, %c0_85] : memref<8x6xf32, #tpu.memory_space<smem>>
    %250 = vector.broadcast %249 : f32 to vector<128xf32>
    %251 = arith.mulf %248, %250 : vector<128xf32>
    %252 = vector.extract_strided_slice %0 {offsets = [1, 0], sizes = [1, 128], strides = [1, 1]} : vector<6x128xf32> to vector<1x128xf32>
    %253 = vector.shape_cast %252 : vector<1x128xf32> to vector<128xf32>
    %c6_86 = arith.constant 6 : index
    %c1_87 = arith.constant 1 : index
    %254 = memref.load %arg1[%c6_86, %c1_87] : memref<8x6xf32, #tpu.memory_space<smem>>
    %255 = vector.broadcast %254 : f32 to vector<128xf32>
    %256 = arith.mulf %253, %255 : vector<128xf32>
    %257 = arith.addf %251, %256 : vector<128xf32>
    %258 = vector.extract_strided_slice %0 {offsets = [2, 0], sizes = [1, 128], strides = [1, 1]} : vector<6x128xf32> to vector<1x128xf32>
    %259 = vector.shape_cast %258 : vector<1x128xf32> to vector<128xf32>
    %c6_88 = arith.constant 6 : index
    %c2_89 = arith.constant 2 : index
    %260 = memref.load %arg1[%c6_88, %c2_89] : memref<8x6xf32, #tpu.memory_space<smem>>
    %261 = vector.broadcast %260 : f32 to vector<128xf32>
    %262 = arith.mulf %259, %261 : vector<128xf32>
    %263 = arith.addf %257, %262 : vector<128xf32>
    %264 = vector.extract_strided_slice %0 {offsets = [3, 0], sizes = [1, 128], strides = [1, 1]} : vector<6x128xf32> to vector<1x128xf32>
    %265 = vector.shape_cast %264 : vector<1x128xf32> to vector<128xf32>
    %c6_90 = arith.constant 6 : index
    %c3_91 = arith.constant 3 : index
    %266 = memref.load %arg1[%c6_90, %c3_91] : memref<8x6xf32, #tpu.memory_space<smem>>
    %267 = vector.broadcast %266 : f32 to vector<128xf32>
    %268 = arith.mulf %265, %267 : vector<128xf32>
    %269 = arith.addf %263, %268 : vector<128xf32>
    %270 = vector.extract_strided_slice %0 {offsets = [4, 0], sizes = [1, 128], strides = [1, 1]} : vector<6x128xf32> to vector<1x128xf32>
    %271 = vector.shape_cast %270 : vector<1x128xf32> to vector<128xf32>
    %c6_92 = arith.constant 6 : index
    %c4_93 = arith.constant 4 : index
    %272 = memref.load %arg1[%c6_92, %c4_93] : memref<8x6xf32, #tpu.memory_space<smem>>
    %273 = vector.broadcast %272 : f32 to vector<128xf32>
    %274 = arith.mulf %271, %273 : vector<128xf32>
    %275 = arith.addf %269, %274 : vector<128xf32>
    %276 = vector.extract_strided_slice %0 {offsets = [5, 0], sizes = [1, 128], strides = [1, 1]} : vector<6x128xf32> to vector<1x128xf32>
    %277 = vector.shape_cast %276 : vector<1x128xf32> to vector<128xf32>
    %c6_94 = arith.constant 6 : index
    %c5_95 = arith.constant 5 : index
    %278 = memref.load %arg1[%c6_94, %c5_95] : memref<8x6xf32, #tpu.memory_space<smem>>
    %279 = vector.broadcast %278 : f32 to vector<128xf32>
    %280 = arith.mulf %277, %279 : vector<128xf32>
    %281 = arith.addf %275, %280 : vector<128xf32>
    %cst_96 = arith.constant 0.00999999977 : f32
    %282 = vector.broadcast %cst_96 : f32 to vector<128xf32>
    %283 = arith.mulf %281, %282 : vector<128xf32>
    %284 = arith.maximumf %281, %283 : vector<128xf32>
    %c6_97 = arith.constant 6 : index
    %c0_98 = arith.constant 0 : index
    %285 = vector.load %arg3[%c6_97, %c0_98] : memref<8x128xf32, #tpu.memory_space<vmem>>, vector<1x128xf32>
    %286 = vector.shape_cast %285 : vector<1x128xf32> to vector<128xf32>
    %287 = vector.shape_cast %284 : vector<128xf32> to vector<1x128xf32>
    tpu.vector_store %arg3[%c6_97, %c0_98], %287 {strides = array<i32>} : memref<8x128xf32, #tpu.memory_space<vmem>>, vector<1x128xf32>,
    %288 = vector.extract_strided_slice %0 {offsets = [0, 0], sizes = [1, 128], strides = [1, 1]} : vector<6x128xf32> to vector<1x128xf32>
    %289 = vector.shape_cast %288 : vector<1x128xf32> to vector<128xf32>
    %c7 = arith.constant 7 : index
    %c0_99 = arith.constant 0 : index
    %290 = memref.load %arg1[%c7, %c0_99] : memref<8x6xf32, #tpu.memory_space<smem>>
    %291 = vector.broadcast %290 : f32 to vector<128xf32>
    %292 = arith.mulf %289, %291 : vector<128xf32>
    %293 = vector.extract_strided_slice %0 {offsets = [1, 0], sizes = [1, 128], strides = [1, 1]} : vector<6x128xf32> to vector<1x128xf32>
    %294 = vector.shape_cast %293 : vector<1x128xf32> to vector<128xf32>
    %c7_100 = arith.constant 7 : index
    %c1_101 = arith.constant 1 : index
    %295 = memref.load %arg1[%c7_100, %c1_101] : memref<8x6xf32, #tpu.memory_space<smem>>
    %296 = vector.broadcast %295 : f32 to vector<128xf32>
    %297 = arith.mulf %294, %296 : vector<128xf32>
    %298 = arith.addf %292, %297 : vector<128xf32>
    %299 = vector.extract_strided_slice %0 {offsets = [2, 0], sizes = [1, 128], strides = [1, 1]} : vector<6x128xf32> to vector<1x128xf32>
    %300 = vector.shape_cast %299 : vector<1x128xf32> to vector<128xf32>
    %c7_102 = arith.constant 7 : index
    %c2_103 = arith.constant 2 : index
    %301 = memref.load %arg1[%c7_102, %c2_103] : memref<8x6xf32, #tpu.memory_space<smem>>
    %302 = vector.broadcast %301 : f32 to vector<128xf32>
    %303 = arith.mulf %300, %302 : vector<128xf32>
    %304 = arith.addf %298, %303 : vector<128xf32>
    %305 = vector.extract_strided_slice %0 {offsets = [3, 0], sizes = [1, 128], strides = [1, 1]} : vector<6x128xf32> to vector<1x128xf32>
    %306 = vector.shape_cast %305 : vector<1x128xf32> to vector<128xf32>
    %c7_104 = arith.constant 7 : index
    %c3_105 = arith.constant 3 : index
    %307 = memref.load %arg1[%c7_104, %c3_105] : memref<8x6xf32, #tpu.memory_space<smem>>
    %308 = vector.broadcast %307 : f32 to vector<128xf32>
    %309 = arith.mulf %306, %308 : vector<128xf32>
    %310 = arith.addf %304, %309 : vector<128xf32>
    %311 = vector.extract_strided_slice %0 {offsets = [4, 0], sizes = [1, 128], strides = [1, 1]} : vector<6x128xf32> to vector<1x128xf32>
    %312 = vector.shape_cast %311 : vector<1x128xf32> to vector<128xf32>
    %c7_106 = arith.constant 7 : index
    %c4_107 = arith.constant 4 : index
    %313 = memref.load %arg1[%c7_106, %c4_107] : memref<8x6xf32, #tpu.memory_space<smem>>
    %314 = vector.broadcast %313 : f32 to vector<128xf32>
    %315 = arith.mulf %312, %314 : vector<128xf32>
    %316 = arith.addf %310, %315 : vector<128xf32>
    %317 = vector.extract_strided_slice %0 {offsets = [5, 0], sizes = [1, 128], strides = [1, 1]} : vector<6x128xf32> to vector<1x128xf32>
    %318 = vector.shape_cast %317 : vector<1x128xf32> to vector<128xf32>
    %c7_108 = arith.constant 7 : index
    %c5_109 = arith.constant 5 : index
    %319 = memref.load %arg1[%c7_108, %c5_109] : memref<8x6xf32, #tpu.memory_space<smem>>
    %320 = vector.broadcast %319 : f32 to vector<128xf32>
    %321 = arith.mulf %318, %320 : vector<128xf32>
    %322 = arith.addf %316, %321 : vector<128xf32>
    %cst_110 = arith.constant 0.00999999977 : f32
    %323 = vector.broadcast %cst_110 : f32 to vector<128xf32>
    %324 = arith.mulf %322, %323 : vector<128xf32>
    %325 = arith.maximumf %322, %324 : vector<128xf32>
    %c7_111 = arith.constant 7 : index
    %c0_112 = arith.constant 0 : index
    %326 = vector.load %arg3[%c7_111, %c0_112] : memref<8x128xf32, #tpu.memory_space<vmem>>, vector<1x128xf32>
    %327 = vector.shape_cast %326 : vector<1x128xf32> to vector<128xf32>
    %328 = vector.shape_cast %325 : vector<128xf32> to vector<1x128xf32>
    tpu.vector_store %arg3[%c7_111, %c0_112], %328 {strides = array<i32>} : memref<8x128xf32, #tpu.memory_space<vmem>>, vector<1x128xf32>,
    return
  }
  func.func @transform_0(%arg0: i32) -> (i32, i32) {
    %c0_i32 = arith.constant 0 : i32
    %c0_i32_0 = arith.constant 0 : i32
    %c0_i32_1 = arith.constant 0 : i32
    return %c0_i32, %c0_i32_0 : i32, i32
  }
  func.func @transform_1(%arg0: i32) -> (i32, i32) {
    %c0_i32 = arith.constant 0 : i32
    %c0_i32_0 = arith.constant 0 : i32
    return %c0_i32, %arg0 : i32, i32
  }
  func.func @transform_2(%arg0: i32) -> (i32, i32) {
    %c0_i32 = arith.constant 0 : i32
    %c0_i32_0 = arith.constant 0 : i32
    return %c0_i32, %arg0 : i32, i32
  }
}

</mosaic_0001>

<llo_original>
// kernel: tpu_custom_call.1
$region0: #{tpu_custom_call.1}
  #allocation0 [shape = 'u32[]', space=smem, size = 0x4, offset = 0x4, fixed_abs, tag = 'smem constant byte address 0x4 - core index']
  #allocation1 [shape = 'u32[144,128]{1,0:T(1,128)}', space=vmem, size = 0x12000, scoped, tag = 'internal scratch']
  %s0 = inlined_call_operand.hbm [shape: f32[8,6], index: 0, kind: input, shape index: {}]
  %s1 = inlined_call_operand.hbm [shape: f32[6,128], index: 1, kind: input, shape index: {}]
  %s2 = inlined_call_operand.hbm [shape: f32[8,128], index: 2, kind: output, shape index: {}]
  %s3 = sld [smem:[#allocation0]]
  $region26: #{tpu_custom_call.1} parent=0
    _
  %s5 = ssub.s32 1, %s3
  %s6 = scalar_select 0, %s5, %s3
  $region1: #{tpu_custom_call.1} parent=0
    #allocation2 [shape = 'u8[4096]{0}', space=smem, size = 0x1000, scoped, tag = 'input window, operand 0, single buffered']
    #allocation3 [shape = 's32[1]{0}', space=sflag, size = 0x4, scoped, tag = 'scoped memory for tpu_custom_call.1']
    #allocation4 [shape = 's32[1]{0}', space=sflag, size = 0x4, scoped, tag = 'scoped memory for tpu_custom_call.1']
    #allocation5 [shape = 's32[1]{0}', space=sflag, size = 0x4, scoped, tag = 'scoped memory for tpu_custom_call.1']
    #allocation6 [shape = 'u8[4096]{0}', space=vmem, size = 0x1000, scoped, tag = 'input window, operand 1, single buffered']
    #allocation7 [shape = 'u8[4096]{0}', space=vmem, size = 0x1000, scoped, tag = 'output window, operand 0, single buffered']
    %7 = vsyncpa [#allocation5], 0
    %8 = vsyncpa [#allocation3], 0
    %9 = vsyncpa [#allocation4], 0
    // Predicated region
    $region2: #{tpu_custom_call.1} parent=1 // pred_check
      _
    $region3: #{tpu_custom_call.1} parent=1 // pred_check_branch
      %11 = sbr.rel (0) target = $region5
    $region4: #{tpu_custom_call.1} parent=1 // pred_region
      %s13 = ssub.s32 128, 128
      %14 = vsyncadd [#allocation5], %s13
      %17 = dma.hbm_to_smem %s0, 128, [#allocation2], [#allocation5]
    $region5: #{tpu_custom_call.1} parent=1 // pred_fallthru
      _
    // Predicated region
    $region6: #{tpu_custom_call.1} parent=1 // pred_check
      _
    $region7: #{tpu_custom_call.1} parent=1 // pred_check_branch
      %19 = sbr.rel (0) target = $region9
    $region8: #{tpu_custom_call.1} parent=1 // pred_region
      %s21 = ssub.s32 128, 128
      %22 = vsyncadd [#allocation3], %s21
      %s24 = sshll.u32 [#allocation6], 4
      %s25 = int_to_ptr.vmem [resolvable:$true] %s24
      %27 = dma.hbm_to_vmem [thread:$0]  %s1, 128, %s25, [#allocation3]
    $region9: #{tpu_custom_call.1} parent=1 // pred_fallthru
      _
    // Predicated region
    $region10: #{tpu_custom_call.1} parent=1 // pred_check
      _
    $region11: #{tpu_custom_call.1} parent=1 // pred_check_branch
      %29 = sbr.rel (0) target = $region13
    $region12: #{tpu_custom_call.1} parent=1 // pred_region
      %30 = dma.done [#allocation5], 128
    $region13: #{tpu_custom_call.1} parent=1 // pred_fallthru
      _
    // Predicated region
    $region14: #{tpu_custom_call.1} parent=1 // pred_check
      _
    $region15: #{tpu_custom_call.1} parent=1 // pred_check_branch
      %32 = sbr.rel (0) target = $region17
    $region16: #{tpu_custom_call.1} parent=1 // pred_region
      %33 = dma.done [#allocation3], 128
    $region17: #{tpu_custom_call.1} parent=1 // pred_fallthru
      _
    %34 = sfence
    %v35 = vld [vmem:[#allocation6] sm:$0x3f]
    %s36 = sld [smem:[#allocation2]]
    %v37 = vstv %s36
    %v38 = vmul.f32 %v35, %v37
    %s39 = sld [smem:[#allocation2 + $0x1]]
    %v40 = vstv %s39
    %v41 = vmul.f32 %v35, %v40
    %v43 = vrot.slane %v41, 1
    %v45 = vadd.f32 %v38, %v43
    %s46 = sld [smem:[#allocation2 + $0x2]]
    %v47 = vstv %s46
    %v48 = vmul.f32 %v35, %v47
    %v50 = vrot.slane %v48, 2
    %v52 = vadd.f32 %v45, %v50
    %s53 = sld [smem:[#allocation2 + $0x3]]
    %v54 = vstv %s53
    %v55 = vmul.f32 %v35, %v54
    %v57 = vrot.slane %v55, 3
    %v59 = vadd.f32 %v52, %v57
    %s60 = sld [smem:[#allocation2 + $0x4]]
    %v61 = vstv %s60
    %v62 = vmul.f32 %v35, %v61
    %v64 = vrot.slane %v62, 4
    %v66 = vadd.f32 %v59, %v64
    %s67 = sld [smem:[#allocation2 + $0x5]]
    %v68 = vstv %s67
    %v69 = vmul.f32 %v35, %v68
    %v71 = vrot.slane %v69, 5
    %v73 = vadd.f32 %v66, %v71
    %v74 = vmul.f32 %v73, 0.01
    %v75 = vmax.f32 %v73, %v74
    %76 = vst [vmem:[#allocation7] sm:$0x1] %v75
    %s77 = sld [smem:[#allocation2 + $0x80]]
    %v78 = vstv %s77
    %v79 = vmul.f32 %v35, %v78
    %s80 = sld [smem:[#allocation2 + $0x81]]
    %v81 = vstv %s80
    %v82 = vmul.f32 %v35, %v81
    %v84 = vrot.slane %v82, 1
    %v86 = vadd.f32 %v79, %v84
    %s87 = sld [smem:[#allocation2 + $0x82]]
    %v88 = vstv %s87
    %v89 = vmul.f32 %v35, %v88
    %v91 = vrot.slane %v89, 2
    %v93 = vadd.f32 %v86, %v91
    %s94 = sld [smem:[#allocation2 + $0x83]]
    %v95 = vstv %s94
    %v96 = vmul.f32 %v35, %v95
    %v98 = vrot.slane %v96, 3
    %v100 = vadd.f32 %v93, %v98
    %s101 = sld [smem:[#allocation2 + $0x84]]
    %v102 = vstv %s101
    %v103 = vmul.f32 %v35, %v102
    %v105 = vrot.slane %v103, 4
    %v107 = vadd.f32 %v100, %v105
    %s108 = sld [smem:[#allocation2 + $0x85]]
    %v109 = vstv %s108
    %v110 = vmul.f32 %v35, %v109
    %v112 = vrot.slane %v110, 5
    %v114 = vadd.f32 %v107, %v112
    %v115 = vmul.f32 %v114, 0.01
    %v116 = vmax.f32 %v114, %v115
    %117 = vst [vmem:[#allocation7 + $0x1] sm:$0x1] %v116
    %s118 = sld [smem:[#allocation2 + $0x100]]
    %v119 = vstv %s118
    %v120 = vmul.f32 %v35, %v119
    %s121 = sld [smem:[#allocation2 + $0x101]]
    %v122 = vstv %s121
    %v123 = vmul.f32 %v35, %v122
    %v125 = vrot.slane %v123, 1
    %v127 = vadd.f32 %v120, %v125
    %s128 = sld [smem:[#allocation2 + $0x102]]
    %v129 = vstv %s128
    %v130 = vmul.f32 %v35, %v129
    %v132 = vrot.slane %v130, 2
    %v134 = vadd.f32 %v127, %v132
    %s135 = sld [smem:[#allocation2 + $0x103]]
    %v136 = vstv %s135
    %v137 = vmul.f32 %v35, %v136
    %v139 = vrot.slane %v137, 3
    %v141 = vadd.f32 %v134, %v139
    %s142 = sld [smem:[#allocation2 + $0x104]]
    %v143 = vstv %s142
    %v144 = vmul.f32 %v35, %v143
    %v146 = vrot.slane %v144, 4
    %v148 = vadd.f32 %v141, %v146
    %s149 = sld [smem:[#allocation2 + $0x105]]
    %v150 = vstv %s149
    %v151 = vmul.f32 %v35, %v150
    %v153 = vrot.slane %v151, 5
    %v155 = vadd.f32 %v148, %v153
    %v156 = vmul.f32 %v155, 0.01
    %v157 = vmax.f32 %v155, %v156
    %158 = vst [vmem:[#allocation7 + $0x2] sm:$0x1] %v157
    %s159 = sld [smem:[#allocation2 + $0x180]]
    %v160 = vstv %s159
    %v161 = vmul.f32 %v35, %v160
    %s162 = sld [smem:[#allocation2 + $0x181]]
    %v163 = vstv %s162
    %v164 = vmul.f32 %v35, %v163
    %v166 = vrot.slane %v164, 1
    %v168 = vadd.f32 %v161, %v166
    %s169 = sld [smem:[#allocation2 + $0x182]]
    %v170 = vstv %s169
    %v171 = vmul.f32 %v35, %v170
    %v173 = vrot.slane %v171, 2
    %v175 = vadd.f32 %v168, %v173
    %s176 = sld [smem:[#allocation2 + $0x183]]
    %v177 = vstv %s176
    %v178 = vmul.f32 %v35, %v177
    %v180 = vrot.slane %v178, 3
    %v182 = vadd.f32 %v175, %v180
    %s183 = sld [smem:[#allocation2 + $0x184]]
    %v184 = vstv %s183
    %v185 = vmul.f32 %v35, %v184
    %v187 = vrot.slane %v185, 4
    %v189 = vadd.f32 %v182, %v187
    %s190 = sld [smem:[#allocation2 + $0x185]]
    %v191 = vstv %s190
    %v192 = vmul.f32 %v35, %v191
    %v194 = vrot.slane %v192, 5
    %v196 = vadd.f32 %v189, %v194
    %v197 = vmul.f32 %v196, 0.01
    %v198 = vmax.f32 %v196, %v197
    %199 = vst [vmem:[#allocation7 + $0x3] sm:$0x1] %v198
    %s200 = sld [smem:[#allocation2 + $0x200]]
    %v201 = vstv %s200
    %v202 = vmul.f32 %v35, %v201
    %s203 = sld [smem:[#allocation2 + $0x201]]
    %v204 = vstv %s203
    %v205 = vmul.f32 %v35, %v204
    %v207 = vrot.slane %v205, 1
    %v209 = vadd.f32 %v202, %v207
    %s210 = sld [smem:[#allocation2 + $0x202]]
    %v211 = vstv %s210
    %v212 = vmul.f32 %v35, %v211
    %v214 = vrot.slane %v212, 2
    %v216 = vadd.f32 %v209, %v214
    %s217 = sld [smem:[#allocation2 + $0x203]]
    %v218 = vstv %s217
    %v219 = vmul.f32 %v35, %v218
    %v221 = vrot.slane %v219, 3
    %v223 = vadd.f32 %v216, %v221
    %s224 = sld [smem:[#allocation2 + $0x204]]
    %v225 = vstv %s224
    %v226 = vmul.f32 %v35, %v225
    %v228 = vrot.slane %v226, 4
    %v230 = vadd.f32 %v223, %v228
    %s231 = sld [smem:[#allocation2 + $0x205]]
    %v232 = vstv %s231
    %v233 = vmul.f32 %v35, %v232
    %v235 = vrot.slane %v233, 5
    %v237 = vadd.f32 %v230, %v235
    %v238 = vmul.f32 %v237, 0.01
    %v239 = vmax.f32 %v237, %v238
    %240 = vst [vmem:[#allocation7 + $0x4] sm:$0x1] %v239
    %s241 = sld [smem:[#allocation2 + $0x280]]
    %v242 = vstv %s241
    %v243 = vmul.f32 %v35, %v242
    %s244 = sld [smem:[#allocation2 + $0x281]]
    %v245 = vstv %s244
    %v246 = vmul.f32 %v35, %v245
    %v248 = vrot.slane %v246, 1
    %v250 = vadd.f32 %v243, %v248
    %s251 = sld [smem:[#allocation2 + $0x282]]
    %v252 = vstv %s251
    %v253 = vmul.f32 %v35, %v252
    %v255 = vrot.slane %v253, 2
    %v257 = vadd.f32 %v250, %v255
    %s258 = sld [smem:[#allocation2 + $0x283]]
    %v259 = vstv %s258
    %v260 = vmul.f32 %v35, %v259
    %v262 = vrot.slane %v260, 3
    %v264 = vadd.f32 %v257, %v262
    %s265 = sld [smem:[#allocation2 + $0x284]]
    %v266 = vstv %s265
    %v267 = vmul.f32 %v35, %v266
    %v269 = vrot.slane %v267, 4
    %v271 = vadd.f32 %v264, %v269
    %s272 = sld [smem:[#allocation2 + $0x285]]
    %v273 = vstv %s272
    %v274 = vmul.f32 %v35, %v273
    %v276 = vrot.slane %v274, 5
    %v278 = vadd.f32 %v271, %v276
    %v279 = vmul.f32 %v278, 0.01
    %v280 = vmax.f32 %v278, %v279
    %281 = vst [vmem:[#allocation7 + $0x5] sm:$0x1] %v280
    %s282 = sld [smem:[#allocation2 + $0x300]]
    %v283 = vstv %s282
    %v284 = vmul.f32 %v35, %v283
    %s285 = sld [smem:[#allocation2 + $0x301]]
    %v286 = vstv %s285
    %v287 = vmul.f32 %v35, %v286
    %v289 = vrot.slane %v287, 1
    %v291 = vadd.f32 %v284, %v289
    %s292 = sld [smem:[#allocation2 + $0x302]]
    %v293 = vstv %s292
    %v294 = vmul.f32 %v35, %v293
    %v296 = vrot.slane %v294, 2
    %v298 = vadd.f32 %v291, %v296
    %s299 = sld [smem:[#allocation2 + $0x303]]
    %v300 = vstv %s299
    %v301 = vmul.f32 %v35, %v300
    %v303 = vrot.slane %v301, 3
    %v305 = vadd.f32 %v298, %v303
    %s306 = sld [smem:[#allocation2 + $0x304]]
    %v307 = vstv %s306
    %v308 = vmul.f32 %v35, %v307
    %v310 = vrot.slane %v308, 4
    %v312 = vadd.f32 %v305, %v310
    %s313 = sld [smem:[#allocation2 + $0x305]]
    %v314 = vstv %s313
    %v315 = vmul.f32 %v35, %v314
    %v317 = vrot.slane %v315, 5
    %v319 = vadd.f32 %v312, %v317
    %v320 = vmul.f32 %v319, 0.01
    %v321 = vmax.f32 %v319, %v320
    %322 = vst [vmem:[#allocation7 + $0x6] sm:$0x1] %v321
    %s323 = sld [smem:[#allocation2 + $0x380]]
    %v324 = vstv %s323
    %v325 = vmul.f32 %v35, %v324
    %s326 = sld [smem:[#allocation2 + $0x381]]
    %v327 = vstv %s326
    %v328 = vmul.f32 %v35, %v327
    %v330 = vrot.slane %v328, 1
    %v332 = vadd.f32 %v325, %v330
    %s333 = sld [smem:[#allocation2 + $0x382]]
    %v334 = vstv %s333
    %v335 = vmul.f32 %v35, %v334
    %v337 = vrot.slane %v335, 2
    %v339 = vadd.f32 %v332, %v337
    %s340 = sld [smem:[#allocation2 + $0x383]]
    %v341 = vstv %s340
    %v342 = vmul.f32 %v35, %v341
    %v344 = vrot.slane %v342, 3
    %v346 = vadd.f32 %v339, %v344
    %s347 = sld [smem:[#allocation2 + $0x384]]
    %v348 = vstv %s347
    %v349 = vmul.f32 %v35, %v348
    %v351 = vrot.slane %v349, 4
    %v353 = vadd.f32 %v346, %v351
    %s354 = sld [smem:[#allocation2 + $0x385]]
    %v355 = vstv %s354
    %v356 = vmul.f32 %v35, %v355
    %v358 = vrot.slane %v356, 5
    %v360 = vadd.f32 %v353, %v358
    %v361 = vmul.f32 %v360, 0.01
    %v362 = vmax.f32 %v360, %v361
    %363 = vst [vmem:[#allocation7 + $0x7] sm:$0x1] %v362
    // Predicated region
    $region18: #{tpu_custom_call.1} parent=1 // pred_check
      _
    $region19: #{tpu_custom_call.1} parent=1 // pred_check_branch
      %365 = sbr.rel (0) target = $region21
    $region20: #{tpu_custom_call.1} parent=1 // pred_region
      %s367 = ssub.s32 128, 128
      %368 = vsyncadd [#allocation4], %s367
      %s370 = sshll.u32 [#allocation7], 4
      %s371 = int_to_ptr.vmem [resolvable:$true] %s370
      %373 = dma.vmem_to_hbm [thread:$0]  %s371, 128, %s2, [#allocation4]
    $region21: #{tpu_custom_call.1} parent=1 // pred_fallthru
      _
    // Predicated region
    $region22: #{tpu_custom_call.1} parent=1 // pred_check
      _
    $region23: #{tpu_custom_call.1} parent=1 // pred_check_branch
      %375 = sbr.rel (0) target = $region25
    $region24: #{tpu_custom_call.1} parent=1 // pred_region
      %376 = dma.done [#allocation4], 128
    $region25: #{tpu_custom_call.1} parent=1 // pred_fallthru
      _
    %377 = vsyncpa [#allocation3], 1
    %378 = vsyncpa [#allocation4], 1
    %379 = vsyncpa [#allocation5], 1

</llo_original>
